<compile_context>
chip_gen: v5e
topology: v5e:2x2
jax: 0.10.0
libtpu: 0.0.40
codegen_flags: <defaults>
</compile_context>

<pallas_src>
import functools

import jax
import jax.numpy as jnp
from jax import lax
from jax.experimental import pallas as pl
from jax.experimental.pallas import tpu as pltpu

LANES = 128        # vreg lane width: last dim of the streamed slab
FOLD_ROWS = 512    # rows folded per inner chunk (bounds VMEM temporaries)


def _round_up(x: int, m: int) -> int:
    return ((x + m - 1) // m) * m


def _sublane_multiple(dtype) -> int:
    # Minimum second-minor tile multiple for packed dtypes:
    # f32 -> 8, bf16/f16 -> 16, int8/bool -> 32.
    return max(8, 32 // max(1, jnp.dtype(dtype).itemsize))


def _dice_kernel(pred_ref, gt_ref, inter_ref, denom_ref, *,
                 thresh, block_rows, fold_rows, steps_per_core, valid_rows,
                 needs_mask):
    """Streams one (block_rows, 128) tile per step and accumulates (8, 128)
    partial sums into the resident per-core output blocks."""
    c = pl.program_id(0)            # TensorCore split axis ("parallel")
    i = pl.program_id(1)            # streaming/reduction axis ("arbitrary")

    @pl.when(i == 0)
    def _init():
        inter_ref[...] = jnp.zeros_like(inter_ref)
        denom_ref[...] = jnp.zeros_like(denom_ref)

    gstep = c * steps_per_core + i          # nominal (unclamped) block index
    n_chunks = block_rows // fold_rows

    def accumulate_chunk(pred, gt, row0, apply_mask):
        # pred/gt: (chunk_rows, 128) values already loaded from VMEM.
        gt = gt.astype(jnp.float32)
        pred_bool = (pred > thresh).astype(jnp.float32)   # compare in native dtype
        if apply_mask:
            # Zero rows past the true end of the (rows, 128) body BEFORE any
            # arithmetic, so garbage in a partial last block cannot poison the sums.
            row = lax.broadcasted_iota(jnp.int32, pred.shape, 0) + row0
            valid = row < valid_rows
            pred_bool = jnp.where(valid, pred_bool, 0.0)
            gt = jnp.where(valid, gt, 0.0)
        chunk_rows = pred.shape[0]
        # Tile-preserving reshape + leading-axis sum: pure VALU adds folding the
        # (chunk_rows, 128) terms down to a single (8, 128) vreg tile.
        inter8 = (pred_bool * gt).reshape(chunk_rows // 8, 8, LANES).sum(axis=0)
        denom8 = (pred_bool + gt).reshape(chunk_rows // 8, 8, LANES).sum(axis=0)
        inter_ref[...] = inter_ref[...] + inter8
        denom_ref[...] = denom_ref[...] + denom8

    def run(apply_mask):
        if n_chunks == 1:
            accumulate_chunk(pred_ref[...], gt_ref[...],
                             gstep * block_rows, apply_mask)
        else:
            def body(j, carry):
                r0 = pl.multiple_of(j * fold_rows, fold_rows)
                accumulate_chunk(pred_ref[pl.ds(r0, fold_rows), :],
                                 gt_ref[pl.ds(r0, fold_rows), :],
                                 gstep * block_rows + r0, apply_mask)
                return carry
            lax.fori_loop(0, n_chunks, body, 0)

    if needs_mask:
        # Only blocks whose nominal row range extends past the valid rows pay for the
        # iota / compare / select path; every other step runs mask-free.
        has_tail = (gstep + 1) * block_rows > valid_rows

        @pl.when(has_tail)
        def _masked():
            run(True)

        @pl.when(jnp.logical_not(has_tail))
        def _unmasked():
            run(False)
    else:
        run(False)


def binary_dice_coefficient(pred, gt, thresh: float = 0.5, smooth: float = 1e-07,
                            block_rows: int = 4096):
    """Pallas TPU implementation of the binary dice coefficient.

    pred, gt: arrays of identical shape NxCx(Dx)HxW (any rank), any real dtype.
    Returns a float32 scalar.
    """
    pred = jnp.asarray(pred)
    gt = jnp.asarray(gt)
    assert pred.shape == gt.shape
    n = int(pred.size)
    assert n > 0

    pred_flat = pred.reshape(-1)        # free (bitcast) reshape of a contiguous array
    gt_flat = gt.reshape(-1)

    thresh = float(thresh)
    sub = max(_sublane_multiple(pred.dtype), _sublane_multiple(gt.dtype))
    rows = n // LANES                   # number of full 128-lane rows

    inter = jnp.float32(0.0)
    denom = jnp.float32(0.0)

    use_kernel = rows >= sub
    n_body = rows * LANES if use_kernel else 0

    if use_kernel:
        if n_body == n:
            pred_body, gt_body = pred_flat, gt_flat          # aligned: zero-copy path
        else:
            # TODO(synk): XLA may still materialize this prefix slice; a fully
            # zero-copy ragged path would need a manual-DMA kernel over the raw 1-D
            # HBM ref.  (Still avoids the previous full-array pad of BOTH inputs.)
            pred_body = lax.slice(pred_flat, (0,), (n_body,))
            gt_body = lax.slice(gt_flat, (0,), (n_body,))
        pred2d = pred_body.reshape(rows, LANES)
        gt2d = gt_body.reshape(rows, LANES)

        # Block rows: multiple of the sublane requirement, capped at the body size.
        br = _round_up(max(int(block_rows), sub), sub)
        br = min(br, (rows // sub) * sub)
        # Chunked fold only when the block is large (bounds VMEM temporaries).
        fold = FOLD_ROWS if (br > FOLD_ROWS and br % FOLD_ROWS == 0) else br

        total_blocks = pl.cdiv(rows, br)
        ncores = 2 if total_blocks >= 2 else 1   # v7x 2-TC split; free on 1-TC chips
        steps_per_core = pl.cdiv(total_blocks, ncores)
        needs_mask = ncores * steps_per_core * br > rows

        def in_index_map(c, i):
            # Clamp so duplicated trailing steps (odd block counts) stay in bounds;
            # their contribution is fully masked out in-kernel.
            return (jnp.minimum(c * steps_per_core + i, total_blocks - 1), 0)

        kernel = functools.partial(
            _dice_kernel, thresh=thresh, block_rows=br, fold_rows=fold,
            steps_per_core=steps_per_core, valid_rows=rows, needs_mask=needs_mask)

        bytes_accessed = n_body * (pred2d.dtype.itemsize + gt2d.dtype.itemsize)
        cost = pl.CostEstimate(flops=6 * n_body, transcendentals=0,
                               bytes_accessed=bytes_accessed)

        inter_p, denom_p = pl.pallas_call(
            kernel,
            out_shape=(jax.ShapeDtypeStruct((ncores, 8, LANES), jnp.float32),
                       jax.ShapeDtypeStruct((ncores, 8, LANES), jnp.float32)),
            grid_spec=pltpu.PrefetchScalarGridSpec(
                num_scalar_prefetch=0,
                grid=(ncores, steps_per_core),
                in_specs=[pl.BlockSpec((br, LANES), in_index_map),
                          pl.BlockSpec((br, LANES), in_index_map)],
                out_specs=[pl.BlockSpec((None, 8, LANES), lambda c, i: (c, 0, 0)),
                           pl.BlockSpec((None, 8, LANES), lambda c, i: (c, 0, 0))],
            ),
            compiler_params=pltpu.CompilerParams(
                dimension_semantics=("parallel", "arbitrary"),
                vmem_limit_bytes=32 * 1024 * 1024),
            cost_estimate=cost,
        )(pred2d, gt2d)

        inter = inter + jnp.sum(inter_p)
        denom = denom + jnp.sum(denom_p)

    if n_body < n:
        # <128-element ragged tail (or a <8-row tiny input): plain jnp, no padding,
        # so padded elements can never be counted as positives (even for thresh < 0).
        tail_pred = lax.slice(pred_flat, (n_body,), (n,))
        tail_gt = lax.slice(gt_flat, (n_body,), (n,)).astype(jnp.float32)
        tail_pb = (tail_pred > thresh).astype(jnp.float32)
        inter = inter + jnp.sum(tail_pb * tail_gt)
        denom = denom + jnp.sum(tail_pb) + jnp.sum(tail_gt)

    return 2.0 * inter / (denom + jnp.float32(smooth))


class BinaryDiceCoefficient:
    """Mirror of the PyTorch module (stateless: just thresh/smooth)."""

    def __init__(self, thresh: float = 0.5, smooth: float = 1e-07):
        self.thresh = thresh
        self.smooth = smooth

    def __call__(self, predictions, targets):
        return binary_dice_coefficient(predictions, targets,
                                        thresh=self.thresh, smooth=self.smooth)


def _reference(pred, gt, thresh=0.5, smooth=1e-07):
    pred_bool = (pred > thresh).astype(jnp.float32)
    gtf = gt.astype(jnp.float32)
    intersec = pred_bool * gtf
    return 2.0 * intersec.sum() / (pred_bool.sum() + gtf.sum() + smooth)


if __name__ == "__main__":
    key = jax.random.PRNGKey(0)
    k1, k2, k3, k4, k5, k6 = jax.random.split(key, 6)

    # 1) Primary NCHW case (aligned: n % 128 == 0, single block, no masking).
    N, C, H, W = 2, 4, 16, 16
    pred = jax.random.uniform(k1, (N, C, H, W), dtype=jnp.float32)
    gt = (jax.random.uniform(k2, (N, C, H, W)) > 0.5).astype(jnp.float32)
    module = BinaryDiceCoefficient(thresh=0.5, smooth=1e-07)
    dice = module(pred, gt)
    jax.block_until_ready(dice)
    ref = _reference(pred, gt)
    assert jnp.allclose(dice, ref, rtol=1e-5, atol=1e-6), (dice, ref)

    # 2) Ragged case (n % 128 != 0): in-kernel last-block row mask + wrapper tail.
    pred2 = jax.random.uniform(k3, (2, 3, 5, 40), dtype=jnp.float32)
    gt2 = (jax.random.uniform(k4, (2, 3, 5, 40)) > 0.5).astype(jnp.float32)
    dice2 = binary_dice_coefficient(pred2, gt2, thresh=0.3)
    jax.block_until_ready(dice2)
    ref2 = _reference(pred2, gt2, thresh=0.3)
    assert jnp.allclose(dice2, ref2, rtol=1e-5, atol=1e-6), (dice2, ref2)

    # 3) Multi-block case with a block size that does not divide the row count:
    #    exercises the 2-way core split, multi-step accumulation, the clamped
    #    duplicate trailing block and the gated partial-block mask.
    pred3 = jax.random.uniform(k5, (4, 2, 128, 256), dtype=jnp.float32)
    gt3 = (jax.random.uniform(k6, (4, 2, 128, 256)) > 0.5).astype(jnp.float32)
    dice3 = binary_dice_coefficient(pred3, gt3, block_rows=768)
    jax.block_until_ready(dice3)
    ref3 = _reference(pred3, gt3)
    assert jnp.allclose(dice3, ref3, rtol=1e-5, atol=1e-6), (dice3, ref3)

    # 4) Same arrays with the default block size: exercises the chunked
    #    (lax.fori_loop) fold of a large block down to the (8, 128) accumulator.
    dice4 = binary_dice_coefficient(pred3, gt3)
    jax.block_until_ready(dice4)
    assert jnp.allclose(dice4, ref3, rtol=1e-5, atol=1e-6), (dice4, ref3)

    print("KERNEL_OK")
</pallas_src>

<mosaic_0001>
module attributes {stable_mosaic.version = 11 : i64} {
  func.func @_dice_kernel(%arg0: i32, %arg1: i32, %arg2: memref<16x128xf32, #tpu.memory_space<vmem>>, %arg3: memref<16x128xf32, #tpu.memory_space<vmem>>, %arg4: memref<1x8x128xf32, #tpu.memory_space<vmem>>, %arg5: memref<1x8x128xf32, #tpu.memory_space<vmem>>) attributes {dimension_semantics = [#tpu.dimension_semantics<parallel>, #tpu.dimension_semantics<arbitrary>], iteration_bounds = array<i64: 1, 1>, scalar_prefetch = 0 : i64, scratch_operands = 0 : i64, tpu.core_type = #tpu.core_type<tc>, window_params = [{transform_indices = @transform_0, window_bounds = array<i64: 16, 128>}, {transform_indices = @transform_1, window_bounds = array<i64: 16, 128>}, {transform_indices = @transform_2, window_bounds = array<i64: 1, 8, 128>}, {transform_indices = @transform_3, window_bounds = array<i64: 1, 8, 128>}]} {
    %c0_i32 = arith.constant 0 : i32
    %0 = arith.cmpi eq, %arg1, %c0_i32 : i32
    %1 = arith.extui %0 : i1 to i32
    %c0_i32_0 = arith.constant 0 : i32
    %2 = arith.cmpi ne, %1, %c0_i32_0 : i32
    scf.if %2 {
      %cst_18 = arith.constant 0.000000e+00 : f32
      %27 = vector.broadcast %cst_18 : f32 to vector<8x128xf32>
      %c0_19 = arith.constant 0 : index
      %c0_20 = arith.constant 0 : index
      %c0_21 = arith.constant 0 : index
      %28 = vector.load %arg4[%c0_19, %c0_20, %c0_21] : memref<1x8x128xf32, #tpu.memory_space<vmem>>, vector<1x8x128xf32>
      %29 = vector.shape_cast %28 : vector<1x8x128xf32> to vector<8x128xf32>
      %30 = vector.shape_cast %27 : vector<8x128xf32> to vector<1x8x128xf32>
      tpu.vector_store %arg4[%c0_19, %c0_20, %c0_21], %30 {strides = array<i32>} : memref<1x8x128xf32, #tpu.memory_space<vmem>>, vector<1x8x128xf32>,
      %cst_22 = arith.constant 0.000000e+00 : f32
      %31 = vector.broadcast %cst_22 : f32 to vector<8x128xf32>
      %c0_23 = arith.constant 0 : index
      %c0_24 = arith.constant 0 : index
      %c0_25 = arith.constant 0 : index
      %32 = vector.load %arg5[%c0_23, %c0_24, %c0_25] : memref<1x8x128xf32, #tpu.memory_space<vmem>>, vector<1x8x128xf32>
      %33 = vector.shape_cast %32 : vector<1x8x128xf32> to vector<8x128xf32>
      %34 = vector.shape_cast %31 : vector<8x128xf32> to vector<1x8x128xf32>
      tpu.vector_store %arg5[%c0_23, %c0_24, %c0_25], %34 {strides = array<i32>} : memref<1x8x128xf32, #tpu.memory_space<vmem>>, vector<1x8x128xf32>,
    } else {
    }
    %c0 = arith.constant 0 : index
    %c0_1 = arith.constant 0 : index
    %3 = vector.load %arg2[%c0, %c0_1] : memref<16x128xf32, #tpu.memory_space<vmem>>, vector<16x128xf32>
    %c0_2 = arith.constant 0 : index
    %c0_3 = arith.constant 0 : index
    %4 = vector.load %arg3[%c0_2, %c0_3] : memref<16x128xf32, #tpu.memory_space<vmem>>, vector<16x128xf32>
    %cst = arith.constant 5.000000e-01 : f32
    %5 = vector.broadcast %cst : f32 to vector<16x128xf32>
    %6 = arith.cmpf ogt, %3, %5 : vector<16x128xf32>
    %7 = arith.extui %6 : vector<16x128xi1> to vector<16x128xi32>
    %8 = arith.sitofp %7 : vector<16x128xi32> to vector<16x128xf32>
    %9 = arith.mulf %8, %4 : vector<16x128xf32>
    %10 = vector.shape_cast %9 : vector<16x128xf32> to vector<2x8x128xf32>
    %cst_4 = arith.constant dense<0.000000e+00> : vector<8x128xf32>
    %11 = vector.multi_reduction <add>, %10, %cst_4 [0] : vector<2x8x128xf32> to vector<8x128xf32>
    %12 = arith.addf %8, %4 : vector<16x128xf32>
    %13 = vector.shape_cast %12 : vector<16x128xf32> to vector<2x8x128xf32>
    %cst_5 = arith.constant dense<0.000000e+00> : vector<8x128xf32>
    %14 = vector.multi_reduction <add>, %13, %cst_5 [0] : vector<2x8x128xf32> to vector<8x128xf32>
    %c0_6 = arith.constant 0 : index
    %c0_7 = arith.constant 0 : index
    %c0_8 = arith.constant 0 : index
    %15 = vector.load %arg4[%c0_6, %c0_7, %c0_8] : memref<1x8x128xf32, #tpu.memory_space<vmem>>, vector<1x8x128xf32>
    %16 = vector.shape_cast %15 : vector<1x8x128xf32> to vector<8x128xf32>
    %17 = arith.addf %16, %11 : vector<8x128xf32>
    %c0_9 = arith.constant 0 : index
    %c0_10 = arith.constant 0 : index
    %c0_11 = arith.constant 0 : index
    %18 = vector.load %arg4[%c0_9, %c0_10, %c0_11] : memref<1x8x128xf32, #tpu.memory_space<vmem>>, vector<1x8x128xf32>
    %19 = vector.shape_cast %18 : vector<1x8x128xf32> to vector<8x128xf32>
    %20 = vector.shape_cast %17 : vector<8x128xf32> to vector<1x8x128xf32>
    tpu.vector_store %arg4[%c0_9, %c0_10, %c0_11], %20 {strides = array<i32>} : memref<1x8x128xf32, #tpu.memory_space<vmem>>, vector<1x8x128xf32>,
    %c0_12 = arith.constant 0 : index
    %c0_13 = arith.constant 0 : index
    %c0_14 = arith.constant 0 : index
    %21 = vector.load %arg5[%c0_12, %c0_13, %c0_14] : memref<1x8x128xf32, #tpu.memory_space<vmem>>, vector<1x8x128xf32>
    %22 = vector.shape_cast %21 : vector<1x8x128xf32> to vector<8x128xf32>
    %23 = arith.addf %22, %14 : vector<8x128xf32>
    %c0_15 = arith.constant 0 : index
    %c0_16 = arith.constant 0 : index
    %c0_17 = arith.constant 0 : index
    %24 = vector.load %arg5[%c0_15, %c0_16, %c0_17] : memref<1x8x128xf32, #tpu.memory_space<vmem>>, vector<1x8x128xf32>
    %25 = vector.shape_cast %24 : vector<1x8x128xf32> to vector<8x128xf32>
    %26 = vector.shape_cast %23 : vector<8x128xf32> to vector<1x8x128xf32>
    tpu.vector_store %arg5[%c0_15, %c0_16, %c0_17], %26 {strides = array<i32>} : memref<1x8x128xf32, #tpu.memory_space<vmem>>, vector<1x8x128xf32>,
    return
  }
  func.func @transform_0(%arg0: i32, %arg1: i32) -> (i32, i32) {
    %c1_i32 = arith.constant 1 : i32
    %0 = arith.muli %arg0, %c1_i32 : i32
    %1 = arith.addi %0, %arg1 : i32
    %c0_i32 = arith.constant 0 : i32
    %2 = arith.minsi %1, %c0_i32 : i32
    %c0_i32_0 = arith.constant 0 : i32
    %c0_i32_1 = arith.constant 0 : i32
    return %2, %c0_i32_0 : i32, i32
  }
  func.func @transform_1(%arg0: i32, %arg1: i32) -> (i32, i32) {
    %c1_i32 = arith.constant 1 : i32
    %0 = arith.muli %arg0, %c1_i32 : i32
    %1 = arith.addi %0, %arg1 : i32
    %c0_i32 = arith.constant 0 : i32
    %2 = arith.minsi %1, %c0_i32 : i32
    %c0_i32_0 = arith.constant 0 : i32
    %c0_i32_1 = arith.constant 0 : i32
    return %2, %c0_i32_0 : i32, i32
  }
  func.func @transform_2(%arg0: i32, %arg1: i32) -> (i32, i32, i32) {
    %c0_i32 = arith.constant 0 : i32
    %c0_i32_0 = arith.constant 0 : i32
    %c0_i32_1 = arith.constant 0 : i32
    return %arg0, %c0_i32, %c0_i32_0 : i32, i32, i32
  }
  func.func @transform_3(%arg0: i32, %arg1: i32) -> (i32, i32, i32) {
    %c0_i32 = arith.constant 0 : i32
    %c0_i32_0 = arith.constant 0 : i32
    %c0_i32_1 = arith.constant 0 : i32
    return %arg0, %c0_i32, %c0_i32_0 : i32, i32, i32
  }
}

</mosaic_0001>

<llo_original>
// kernel: tpu_custom_call.1
$region0: #{tpu_custom_call.1}
  #allocation0 [shape = 'u32[]', space=smem, size = 0x4, offset = 0x4, fixed_abs, tag = 'smem constant byte address 0x4 - core index']
  #allocation1 [shape = 'u32[72,128]{1,0:T(1,128)}', space=vmem, size = 0x9000, scoped, tag = 'internal scratch']
  %s0 = inlined_call_operand.hbm [shape: f32[16,128], index: 0, kind: input, shape index: {}]
  %s1 = inlined_call_operand.hbm [shape: f32[16,128], index: 1, kind: input, shape index: {}]
  %s2 = inlined_call_operand.hbm [shape: f32[1,8,128], index: 2, kind: output, shape index: {0}]
  %s3 = inlined_call_operand.hbm [shape: f32[1,8,128], index: 3, kind: output, shape index: {1}]
  %4 = xla_tuple %s2, %s3
  %s5 = sld [smem:[#allocation0]]
  $region38: #{tpu_custom_call.1} parent=0
    _
  %s7 = ssub.s32 1, %s5
  %s8 = scalar_select 0, %s7, %s5
  $region1: #{tpu_custom_call.1} parent=0
    #allocation2 [shape = 'u8[8192]{0}', space=vmem, size = 0x2000, scoped, tag = 'input window, operand 0, single buffered']
    #allocation3 [shape = 's32[1]{0}', space=sflag, size = 0x4, scoped, tag = 'scoped memory for tpu_custom_call.1']
    #allocation4 [shape = 's32[1]{0}', space=sflag, size = 0x4, scoped, tag = 'scoped memory for tpu_custom_call.1']
    #allocation5 [shape = 'u8[8192]{0}', space=vmem, size = 0x2000, scoped, tag = 'input window, operand 1, single buffered']
    #allocation6 [shape = 's32[1]{0}', space=sflag, size = 0x4, scoped, tag = 'scoped memory for tpu_custom_call.1']
    #allocation7 [shape = 'u8[4096]{0}', space=vmem, size = 0x1000, scoped, tag = 'output window, operand 0, single buffered']
    #allocation8 [shape = 'u8[4096]{0}', space=vmem, size = 0x1000, scoped, tag = 'output window, operand 1, single buffered']
    #allocation9 [shape = 's32[1]{0}', space=sflag, size = 0x4, scoped, tag = 'scoped memory for tpu_custom_call.1']
    %9 = vsyncpa [#allocation3], 0
    %10 = vsyncpa [#allocation6], 0
    %11 = vsyncpa [#allocation4], 0
    %12 = vsyncpa [#allocation9], 0
    // Predicated region
    $region2: #{tpu_custom_call.1} parent=1 // pred_check
      _
    $region3: #{tpu_custom_call.1} parent=1 // pred_check_branch
      %14 = sbr.rel (0) target = $region5
    $region4: #{tpu_custom_call.1} parent=1 // pred_region
      %s15 = sadd.s32 0, 0
      %p16 = scmp.lt.s32.totalorder %s15, 0
      %s17 = scalar_select %p16, %s15, 0
      %s18 = smul.u32 2, %s17
      %20 = vsyncadd [#allocation3], 0
      %s21 = smul.addr %s18, 8
      %s22 = scalar_lea.hbm %s0, %s21
      %s23 = sshll.u32 %s22, 4
      %s24 = int_to_ptr.hbm [resolvable:$true] %s23
      %s25 = sshll.u32 [#allocation2], 4
      %s26 = int_to_ptr.vmem [resolvable:$true] %s25
      %31 = dma.hbm_to_vmem [thread:$0]  %s24, 256, %s26, [#allocation3], 128, 128, 8
    $region5: #{tpu_custom_call.1} parent=1 // pred_fallthru
      _
    // Predicated region
    $region6: #{tpu_custom_call.1} parent=1 // pred_check
      _
    $region7: #{tpu_custom_call.1} parent=1 // pred_check_branch
      %33 = sbr.rel (0) target = $region9
    $region8: #{tpu_custom_call.1} parent=1 // pred_region
      %s34 = sadd.s32 0, 0
      %p35 = scmp.lt.s32.totalorder %s34, 0
      %s36 = scalar_select %p35, %s34, 0
      %s37 = smul.u32 2, %s36
      %39 = vsyncadd [#allocation6], 0
      %s40 = smul.addr %s37, 8
      %s41 = scalar_lea.hbm %s1, %s40
      %s42 = sshll.u32 %s41, 4
      %s43 = int_to_ptr.hbm [resolvable:$true] %s42
      %s44 = sshll.u32 [#allocation5], 4
      %s45 = int_to_ptr.vmem [resolvable:$true] %s44
      %50 = dma.hbm_to_vmem [thread:$0]  %s43, 256, %s45, [#allocation6], 128, 128, 8
    $region9: #{tpu_custom_call.1} parent=1 // pred_fallthru
      _
    // Predicated region
    $region10: #{tpu_custom_call.1} parent=1 // pred_check
      _
    $region11: #{tpu_custom_call.1} parent=1 // pred_check_branch
      %52 = sbr.rel (0) target = $region13
    $region12: #{tpu_custom_call.1} parent=1 // pred_region
      %54 = dma.done [#allocation3], 256
    $region13: #{tpu_custom_call.1} parent=1 // pred_fallthru
      _
    // Predicated region
    $region14: #{tpu_custom_call.1} parent=1 // pred_check
      _
    $region15: #{tpu_custom_call.1} parent=1 // pred_check_branch
      %56 = sbr.rel (0) target = $region17
    $region16: #{tpu_custom_call.1} parent=1 // pred_region
      %58 = dma.done [#allocation6], 256
    $region17: #{tpu_custom_call.1} parent=1 // pred_fallthru
      _
    %s59 = sadd.s32 0, 0
    %p60 = scmp.lt.s32.totalorder %s59, 0
    %s61 = scalar_select %p60, %s59, 0
    %s62 = smul.u32 2, %s61
    %s63 = sadd.s32 0, 0
    %p64 = scmp.lt.s32.totalorder %s63, 0
    %s65 = scalar_select %p64, %s63, 0
    %s66 = smul.u32 2, %s65
    %p67 = scmp.eq.s32.totalorder 0, 0
    // Predicated region
    $region18: #{tpu_custom_call.1} parent=1 // pred_check
      %p68 = pneg %p67
    $region19: #{tpu_custom_call.1} parent=1 // pred_check_branch
      %70 = sbr.rel (%p68) target = $region21
    $region20: #{tpu_custom_call.1} parent=1 // pred_region
      %71 = vst [vmem:[#allocation7] sm:$0xff] 0.0
      %72 = vst [vmem:[#allocation8] sm:$0xff] 0.0
    $region21: #{tpu_custom_call.1} parent=1 // pred_fallthru
      _
    %v73 = vld [vmem:[#allocation2] sm:$0xff]
    %v74 = vld [vmem:[#allocation2 + $0x8] sm:$0xff]
    %v75 = vld [vmem:[#allocation5] sm:$0xff]
    %v76 = vld [vmem:[#allocation5 + $0x8] sm:$0xff]
    %vm77 = vcmp.gt.f32.partialorder %v73, 0.5
    %vm78 = vcmp.gt.f32.partialorder %v74, 0.5
    %v79 = vsel %vm77, 1, 0
    %v80 = vsel %vm78, 1, 0
    %v81 = vcvt.s32.f32 %v79
    %v82 = vcvt.s32.f32 %v80
    %v83 = vmul.f32 %v81, %v75
    %v84 = vmul.f32 %v82, %v76
    %v85 = vadd.f32 %v83, %v84
    %v86 = vadd.f32 %v81, %v75
    %v87 = vadd.f32 %v82, %v76
    %v88 = vadd.f32 %v86, %v87
    %v89 = vld [vmem:[#allocation7] sm:$0xff]
    %v90 = vadd.f32 %v89, %v85
    %91 = vst [vmem:[#allocation7] sm:$0xff] %v90
    %v92 = vld [vmem:[#allocation8] sm:$0xff]
    %v93 = vadd.f32 %v92, %v88
    %94 = vst [vmem:[#allocation8] sm:$0xff] %v93
    // Predicated region
    $region22: #{tpu_custom_call.1} parent=1 // pred_check
      _
    $region23: #{tpu_custom_call.1} parent=1 // pred_check_branch
      %96 = sbr.rel (0) target = $region25
    $region24: #{tpu_custom_call.1} parent=1 // pred_region
      %98 = vsyncadd [#allocation4], 0
      %s100 = sshll.u32 [#allocation7], 4
      %s101 = int_to_ptr.vmem [resolvable:$true] %s100
      %s102 = sshll.u32 %s2, 4
      %s103 = int_to_ptr.hbm [resolvable:$true] %s102
      %105 = dma.vmem_to_hbm [thread:$0]  %s101, 128, %s103, [#allocation4]
    $region25: #{tpu_custom_call.1} parent=1 // pred_fallthru
      _
    // Predicated region
    $region26: #{tpu_custom_call.1} parent=1 // pred_check
      _
    $region27: #{tpu_custom_call.1} parent=1 // pred_check_branch
      %107 = sbr.rel (0) target = $region29
    $region28: #{tpu_custom_call.1} parent=1 // pred_region
      %109 = vsyncadd [#allocation9], 0
      %s111 = sshll.u32 [#allocation8], 4
      %s112 = int_to_ptr.vmem [resolvable:$true] %s111
      %s113 = sshll.u32 %s3, 4
      %s114 = int_to_ptr.hbm [resolvable:$true] %s113
      %116 = dma.vmem_to_hbm [thread:$0]  %s112, 128, %s114, [#allocation9]
    $region29: #{tpu_custom_call.1} parent=1 // pred_fallthru
      _
    // Predicated region
    $region30: #{tpu_custom_call.1} parent=1 // pred_check
      _
    $region31: #{tpu_custom_call.1} parent=1 // pred_check_branch
      %118 = sbr.rel (0) target = $region33
    $region32: #{tpu_custom_call.1} parent=1 // pred_region
      %120 = dma.done [#allocation4], 128
    $region33: #{tpu_custom_call.1} parent=1 // pred_fallthru
      _
    // Predicated region
    $region34: #{tpu_custom_call.1} parent=1 // pred_check
      _
    $region35: #{tpu_custom_call.1} parent=1 // pred_check_branch
      %122 = sbr.rel (0) target = $region37
    $region36: #{tpu_custom_call.1} parent=1 // pred_region
      %124 = dma.done [#allocation9], 128
    $region37: #{tpu_custom_call.1} parent=1 // pred_fallthru
      _
    %125 = vsyncpa [#allocation3], 1
    %126 = vsyncpa [#allocation6], 1
    %127 = vsyncpa [#allocation4], 1
    %128 = vsyncpa [#allocation9], 1

</llo_original>
